<compile_context>
chip_gen: v7x
topology: tpu7x:2x2x1
jax: 0.10.0
libtpu: 0.0.40
codegen_flags: <defaults>
</compile_context>

<pallas_src>
import functools

import jax
import jax.numpy as jnp
from jax.experimental import pallas as pl
from jax.experimental.pallas import tpu as pltpu


def _rmsnorm_kernel(x_ref, w_ref, o_ref, *, eps, inv_d):
    # x_ref: (tile_rows, d_model), w_ref: (1, d_model), o_ref: (tile_rows, d_model)
    x = x_ref[...].astype(jnp.float32)                       # x.float()
    ms = jnp.sum(x * x, axis=-1, keepdims=True) * inv_d      # mean of squares (XLU reduce + const mul)
    inv = jax.lax.rsqrt(ms + eps)                            # rsqrt on EUP
    normed = (x * inv).astype(x_ref.dtype)                   # .type_as(x)  (keep torch rounding order)
    o_ref[...] = (w_ref[...] * normed).astype(o_ref.dtype)   # weight * normed


def _pick_tile_rows(rows: int, d_model: int, itemsize: int) -> int:
    """Largest row tile that (a) respects sublane packing and (b) keeps the
    double-buffered in+out working set within a budget safe on v5e/v6e/v7x."""
    # Sublane packing: 8 rows for 32-bit, 16 for 16-bit, 32 for 8-bit dtypes.
    pack = 8 * max(1, 4 // itemsize)
    if rows <= pack:
        # Single block covering the full row dim is always a legal block shape.
        return rows
    # Working set ~= 2 buffers x (input tile + output tile) = 4 * tile_bytes.
    budget_bytes = 24 * 1024 * 1024          # fits v7x's 64 MiB VMEM with headroom
    bytes_per_row = d_model * itemsize
    max_rows = max(pack, budget_bytes // (4 * bytes_per_row))
    tile = min(1024, max_rows, rows)
    tile = max(pack, (tile // pack) * pack)   # keep a multiple of the packing
    return tile


def rmsnorm(x: jax.Array, weight: jax.Array, eps: float = 1e-6,
            tile_rows: int | None = None) -> jax.Array:
    """RMSNorm over the last axis of x; weight has shape (d_model,)."""
    orig_shape = x.shape
    d_model = orig_shape[-1]
    x2d = x.reshape(-1, d_model)
    rows = x2d.shape[0]
    itemsize = jnp.dtype(x.dtype).itemsize

    if tile_rows is None:
        tile_rows = _pick_tile_rows(rows, d_model, itemsize)
    tile_rows = min(tile_rows, rows)

    w2d = weight.reshape(1, d_model)
    grid = (pl.cdiv(rows, tile_rows),)        # ragged last block handled by Pallas

    out = pl.pallas_call(
        functools.partial(_rmsnorm_kernel, eps=eps, inv_d=1.0 / d_model),
        out_shape=jax.ShapeDtypeStruct((rows, d_model), x.dtype),
        grid_spec=pltpu.PrefetchScalarGridSpec(
            num_scalar_prefetch=0,
            grid=grid,
            in_specs=[
                pl.BlockSpec((tile_rows, d_model), lambda i: (i, 0)),
                pl.BlockSpec((1, d_model), lambda i: (0, 0)),
            ],
            out_specs=pl.BlockSpec((tile_rows, d_model), lambda i: (i, 0)),
        ),
        compiler_params=pltpu.CompilerParams(
            dimension_semantics=("parallel",),        # shard rows across TCs (v7x)
            vmem_limit_bytes=48 * 1024 * 1024,        # > v5e/v6e defaults, < v7x physical
        ),
    )(x2d, w2d)

    return out.reshape(orig_shape)


def rmsnorm_ref(x, weight, eps=1e-6):
    xf = x.astype(jnp.float32)
    inv = jax.lax.rsqrt(jnp.mean(xf * xf, axis=-1, keepdims=True) + eps)
    return (weight * (xf * inv).astype(x.dtype)).astype(x.dtype)


if __name__ == "__main__":
    key = jax.random.PRNGKey(0)

    # Main test: shapes implied by the module's forward (batch, seq, d_model).
    batch, seq, d_model = 2, 8, 128
    x = jax.random.normal(key, (batch, seq, d_model), dtype=jnp.float32)
    weight = jnp.ones((d_model,), dtype=jnp.float32)   # module init: ones(d_model)

    out = rmsnorm(x, weight, eps=1e-6)
    jax.block_until_ready(out)
    ref = rmsnorm_ref(x, weight, eps=1e-6)
    assert out.shape == x.shape
    assert jnp.allclose(out, ref, atol=1e-5, rtol=1e-5)

    # Ragged-rows test: rows not a multiple of the tile -> exercises the
    # cdiv grid / masked last block (no wrapper-side padding copies).
    k1, k2 = jax.random.split(key)
    x2 = jax.random.normal(k1, (5, 4, d_model), dtype=jnp.float32)   # 20 rows
    w2 = jax.random.normal(k2, (d_model,), dtype=jnp.float32) * 0.1 + 1.0
    out2 = rmsnorm(x2, w2, eps=1e-6, tile_rows=8)                    # grid=(3,), partial tail
    jax.block_until_ready(out2)
    assert jnp.allclose(out2, rmsnorm_ref(x2, w2), atol=1e-5, rtol=1e-5)

    # bf16 test: tile picker aligns to 16-row sublane packing.
    x3 = jax.random.normal(key, (4, 16, d_model), dtype=jnp.bfloat16)
    out3 = rmsnorm(x3, weight, eps=1e-6)
    jax.block_until_ready(out3)
    assert jnp.allclose(out3.astype(jnp.float32),
                        rmsnorm_ref(x3, weight).astype(jnp.float32),
                        atol=5e-2, rtol=5e-2)

    print("KERNEL_OK")
</pallas_src>

<mosaic_0001>
module attributes {stable_mosaic.version = 11 : i64} {
  func.func @_rmsnorm_kernel(%arg0: i32, %arg1: memref<16x128xf32, #tpu.memory_space<vmem>>, %arg2: memref<1x128xf32, #tpu.memory_space<vmem>>, %arg3: memref<16x128xf32, #tpu.memory_space<vmem>>) attributes {dimension_semantics = [#tpu.dimension_semantics<parallel>], iteration_bounds = array<i64: 1>, scalar_prefetch = 0 : i64, scratch_operands = 0 : i64, tpu.core_type = #tpu.core_type<tc>, window_params = [{transform_indices = @transform_0, window_bounds = array<i64: 16, 128>}, {pipeline_mode = #tpu.pipeline_mode<synchronous>, transform_indices = @transform_1, window_bounds = array<i64: 1, 128>}, {transform_indices = @transform_2, window_bounds = array<i64: 16, 128>}]} {
    %c0 = arith.constant 0 : index
    %c0_0 = arith.constant 0 : index
    %0 = vector.load %arg1[%c0, %c0_0] : memref<16x128xf32, #tpu.memory_space<vmem>>, vector<16x128xf32>
    %1 = arith.mulf %0, %0 : vector<16x128xf32>
    %cst = arith.constant dense<0.000000e+00> : vector<16xf32>
    %2 = vector.multi_reduction <add>, %1, %cst [1] : vector<16x128xf32> to vector<16xf32>
    %3 = vector.shape_cast %2 : vector<16xf32> to vector<16x1xf32>
    %cst_1 = arith.constant 7.812500e-03 : f32
    %4 = vector.broadcast %cst_1 : f32 to vector<16x1xf32>
    %5 = arith.mulf %3, %4 : vector<16x1xf32>
    %cst_2 = arith.constant 9.99999997E-7 : f32
    %6 = vector.broadcast %cst_2 : f32 to vector<16x1xf32>
    %7 = arith.addf %5, %6 : vector<16x1xf32>
    %8 = math.rsqrt %7 : vector<16x1xf32>
    %9 = vector.broadcast %8 : vector<16x1xf32> to vector<16x128xf32>
    %10 = arith.mulf %0, %9 : vector<16x128xf32>
    %c0_3 = arith.constant 0 : index
    %c0_4 = arith.constant 0 : index
    %11 = vector.load %arg2[%c0_3, %c0_4] : memref<1x128xf32, #tpu.memory_space<vmem>>, vector<1x128xf32>
    %12 = vector.broadcast %11 : vector<1x128xf32> to vector<16x128xf32>
    %13 = arith.mulf %12, %10 : vector<16x128xf32>
    %c0_5 = arith.constant 0 : index
    %c0_6 = arith.constant 0 : index
    %14 = vector.load %arg3[%c0_5, %c0_6] : memref<16x128xf32, #tpu.memory_space<vmem>>, vector<16x128xf32>
    tpu.vector_store %arg3[%c0_5, %c0_6], %13 {strides = array<i32>} : memref<16x128xf32, #tpu.memory_space<vmem>>, vector<16x128xf32>,
    return
  }
  func.func @transform_0(%arg0: i32) -> (i32, i32) {
    %c0_i32 = arith.constant 0 : i32
    %c0_i32_0 = arith.constant 0 : i32
    return %arg0, %c0_i32 : i32, i32
  }
  func.func @transform_1(%arg0: i32) -> (i32, i32) {
    %c0_i32 = arith.constant 0 : i32
    %c0_i32_0 = arith.constant 0 : i32
    %c0_i32_1 = arith.constant 0 : i32
    return %c0_i32, %c0_i32_0 : i32, i32
  }
  func.func @transform_2(%arg0: i32) -> (i32, i32) {
    %c0_i32 = arith.constant 0 : i32
    %c0_i32_0 = arith.constant 0 : i32
    return %arg0, %c0_i32 : i32, i32
  }
}

</mosaic_0001>

<llo_original>
// kernel: tpu_custom_call.1
$region0: #{tpu_custom_call.1}
  #allocation0 [shape = 'u32[]', space=smem, size = 0x4, offset = 0x4, fixed_abs, tag = 'smem constant byte address 0x4 - core index']
  #allocation1 [shape = 'u32[144,128]{1,0:T(1,128)}', space=vmem, size = 0x12000, scoped, tag = 'internal scratch']
  %s0 = inlined_call_operand.hbm [shape: f32[16,128], index: 0, kind: input, shape index: {}]
  %s1 = inlined_call_operand.vmem [shape: f32[1,128], index: 1, kind: input, shape index: {}]
  %s2 = inlined_call_operand.hbm [shape: f32[16,128], index: 2, kind: output, shape index: {}]
  %s3 = sld [smem:[#allocation0]]
  $region22: #{tpu_custom_call.1} parent=0
    _
  %s5 = ssub.s32 1, %s3
  %s6 = scalar_select 0, %s5, %s3
  $region1: #{tpu_custom_call.1} parent=0
    #allocation2 [shape = 'u8[8192]{0}', space=vmem, size = 0x2000, scoped, tag = 'input window, operand 0, single buffered']
    #allocation3 [shape = 's32[1]{0}', space=sflag, size = 0x4, scoped, tag = 'scoped memory for tpu_custom_call.1']
    #allocation4 [shape = 's32[1]{0}', space=sflag, size = 0x4, scoped, tag = 'scoped memory for tpu_custom_call.1']
    #allocation5 [shape = 'u8[8192]{0}', space=vmem, size = 0x2000, scoped, tag = 'output window, operand 0, single buffered']
    %7 = vsyncpa [#allocation3], 0
    %8 = vsyncpa [#allocation4], 0
    // Predicated region
    $region2: #{tpu_custom_call.1} parent=1 // pred_check
      _
    $region3: #{tpu_custom_call.1} parent=1 // pred_check_branch
      %10 = sbr.rel (0) target = $region5
    $region4: #{tpu_custom_call.1} parent=1 // pred_region
      %s12 = ssub.s32 256, 256
      %13 = vsyncadd [#allocation3], %s12
      %s14 = sshll.u32 [#allocation2], 4
      %s15 = int_to_ptr.vmem [resolvable:$true] %s14
      %20 = dma.hbm_to_vmem [thread:$0]  %s0, 256, %s15, [#allocation3], 128, 128, 8
    $region5: #{tpu_custom_call.1} parent=1 // pred_fallthru
      _
    // Predicated region
    $region6: #{tpu_custom_call.1} parent=1 // pred_check
      _
    $region7: #{tpu_custom_call.1} parent=1 // pred_check_branch
      %22 = sbr.rel (0) target = $region9
    $region8: #{tpu_custom_call.1} parent=1 // pred_region
      _
    $region9: #{tpu_custom_call.1} parent=1 // pred_fallthru
      _
    // Predicated region
    $region10: #{tpu_custom_call.1} parent=1 // pred_check
      _
    $region11: #{tpu_custom_call.1} parent=1 // pred_check_branch
      %24 = sbr.rel (0) target = $region13
    $region12: #{tpu_custom_call.1} parent=1 // pred_region
      %25 = dma.done [#allocation3], 256
    $region13: #{tpu_custom_call.1} parent=1 // pred_fallthru
      _
    %v26 = vld [vmem:[#allocation2] sm:$0xff]
    %v27 = vld [vmem:[#allocation2 + $0x8] sm:$0xff]
    %v28 = vmul.f32 %v26, %v26
    %v29 = vmul.f32 %v27, %v27
    %30 = vadd.xlane.f32.xlu0 %v28
    %v31 = vpop.xlane.xlu0 %30
    %32 = vadd.xlane.f32.xlu0 %v29
    %v33 = vpop.xlane.xlu0 %32
    %v34 = vmul.f32 %v31, 0.0078125
    %v35 = vmul.f32 %v33, 0.0078125
    %v36 = vadd.f32 %v34, 1e-06
    %v37 = vadd.f32 %v35, 1e-06
    %v38 = vrsqrt.pop %v36
    %v39 = vrsqrt.pop %v37
    %v40 = vmul.f32 %v26, %v38
    %v41 = vmul.f32 %v27, %v39
    %v42 = vld [vmem:[%s1] sm:$0x1]
    %v44 = vlaneseq
    %v45 = vshrl.u32 %v44, 7
    %v46 = vsub.s32 0, %v45
    %v47 = vrot.slane %v42, %v46
    %v49 = vmul.f32 %v47, %v40
    %v50 = vmul.f32 %v47, %v41
    %51 = vst [vmem:[#allocation5] sm:$0xff] %v49
    %52 = vst [vmem:[#allocation5 + $0x8] sm:$0xff] %v50
    // Predicated region
    $region14: #{tpu_custom_call.1} parent=1 // pred_check
      _
    $region15: #{tpu_custom_call.1} parent=1 // pred_check_branch
      %54 = sbr.rel (0) target = $region17
    $region16: #{tpu_custom_call.1} parent=1 // pred_region
      %s56 = ssub.s32 256, 256
      %57 = vsyncadd [#allocation4], %s56
      %s58 = sshll.u32 [#allocation5], 4
      %s59 = int_to_ptr.vmem [resolvable:$true] %s58
      %64 = dma.vmem_to_hbm [thread:$0]  %s59, 256, %s2, [#allocation4], 128, 128, 8
    $region17: #{tpu_custom_call.1} parent=1 // pred_fallthru
      _
    // Predicated region
    $region18: #{tpu_custom_call.1} parent=1 // pred_check
      _
    $region19: #{tpu_custom_call.1} parent=1 // pred_check_branch
      %66 = sbr.rel (0) target = $region21
    $region20: #{tpu_custom_call.1} parent=1 // pred_region
      %67 = dma.done [#allocation4], 256
    $region21: #{tpu_custom_call.1} parent=1 // pred_fallthru
      _
    %68 = vsyncpa [#allocation3], 1
    %69 = vsyncpa [#allocation4], 1

</llo_original>
